<compile_context>
chip_gen: v7x
topology: tpu7x:2x2x1
jax: 0.10.0
libtpu: 0.0.40
codegen_flags: <defaults>
</compile_context>

<pallas_src>
import functools
import math

import jax
import jax.numpy as jnp
from jax import lax
from jax.experimental import pallas as pl
from jax.experimental.pallas import tpu as pltpu


def _mha_head_kernel(x_ref, wq_ref, wk_ref, wv_ref, o_ref, k_scr, v_scr,
                     *, q_tile, kv_tile, d_out, compute_dtype):
    # x_ref       : (1, T, d_in)        full sequence of one batch element
    # wq/wk/wv_ref: (1, d_in, d_out)    this head's projection weights
    # o_ref       : (1, 1, q_tile, d_out) this head's context for this q tile
    # k_scr/v_scr : (T, d_out)          per-(batch, head) K/V, reused across q tiles
    qi = pl.program_id(2)

    # ---- K / V projections: once per (batch, head), reused across query tiles.
    @pl.when(qi == 0)
    def _():
        x_full = x_ref[0]                                          # (T, d_in)
        k_scr[...] = jnp.dot(x_full, wk_ref[0],
                             preferred_element_type=jnp.float32).astype(k_scr.dtype)
        v_scr[...] = jnp.dot(x_full, wv_ref[0],
                             preferred_element_type=jnp.float32).astype(v_scr.dtype)

    # ---- Q projection for this query tile; 1/sqrt(d_out) folded into q.
    scale = 1.0 / math.sqrt(d_out)
    q_start = pl.multiple_of(qi * q_tile, q_tile)
    xq = x_ref[0, pl.ds(q_start, q_tile), :]                       # (q_tile, d_in)
    q = jnp.dot(xq, wq_ref[0], preferred_element_type=jnp.float32) * scale
    q = q.astype(compute_dtype)                                    # (q_tile, d_out)

    # ---- Flash-style online softmax over causal KV tiles.
    kv_tiles = (qi + 1) * (q_tile // kv_tile)    # causal: keys <= last query row

    def body(kv, carry):
        m, l, acc = carry
        k_start = pl.multiple_of(kv * kv_tile, kv_tile)
        k_t = k_scr[pl.ds(k_start, kv_tile), :]                    # (kv_tile, d_out)
        v_t = v_scr[pl.ds(k_start, kv_tile), :]
        # q @ k^T without materializing a transpose (contract last dims).
        s = lax.dot_general(q, k_t, (((1,), (1,)), ((), ())),
                            preferred_element_type=jnp.float32)    # (q_tile, kv_tile)
        row = qi * q_tile + lax.broadcasted_iota(jnp.int32, s.shape, 0)
        col = kv * kv_tile + lax.broadcasted_iota(jnp.int32, s.shape, 1)
        s = jnp.where(col > row, jnp.float32(-1e30), s)

        m_new = jnp.maximum(m, s.max(axis=-1, keepdims=True))
        alpha = jnp.exp(m - m_new)
        p = jnp.exp(s - m_new)
        l_new = alpha * l + p.sum(axis=-1, keepdims=True)
        acc_new = alpha * acc + jnp.dot(p.astype(compute_dtype), v_t,
                                        preferred_element_type=jnp.float32)
        return m_new, l_new, acc_new

    m0 = jnp.full((q_tile, 1), -jnp.inf, jnp.float32)
    l0 = jnp.zeros((q_tile, 1), jnp.float32)
    acc0 = jnp.zeros((q_tile, d_out), jnp.float32)
    m, l, acc = lax.fori_loop(0, kv_tiles, body, (m0, l0, acc0))

    # (attention-weight dropout == identity in eval mode)
    # Exact reciprocal: the denominator is only (q_tile, 1), approx is not needed.
    o_ref[0, 0] = (acc * pl.reciprocal(l, approx=False)).astype(o_ref.dtype)


def multi_head_attention_wrapper(x, wq, wk, wv, *, q_tile=None, kv_tile=None,
                                 compute_dtype=jnp.bfloat16):
    """Pallas equivalent of MultiHeadAttentionWrapper.forward (eval mode).

    x          : (B, T, d_in)
    wq, wk, wv : (H, d_in, d_out)   per-head projection weights (qkv_bias=False)
    returns    : (B, T, H * d_out)  == torch.cat([head(x) for head in heads], -1)

    compute_dtype: MXU operand dtype (bf16 recommended on v5e/v6e/v7x);
    softmax math and matmul accumulation are always f32.
    """
    B, T, d_in = x.shape
    H, _, d_out = wq.shape

    if q_tile is None:
        q_tile = T if T <= 256 else 256
    if kv_tile is None:
        kv_tile = q_tile
    assert T % q_tile == 0 and q_tile % kv_tile == 0
    assert q_tile == T or q_tile % 8 == 0
    assert kv_tile == T or kv_tile % 8 == 0

    # Cast MXU operands once in the wrapper (halves HBM traffic in bf16 mode).
    x_c = x.astype(compute_dtype)
    wq_c = wq.astype(compute_dtype)
    wk_c = wk.astype(compute_dtype)
    wv_c = wv.astype(compute_dtype)

    kernel = functools.partial(_mha_head_kernel, q_tile=q_tile, kv_tile=kv_tile,
                               d_out=d_out, compute_dtype=compute_dtype)

    out = pl.pallas_call(
        kernel,
        out_shape=jax.ShapeDtypeStruct((B, H, T, d_out), jnp.float32),
        grid_spec=pltpu.PrefetchScalarGridSpec(
            num_scalar_prefetch=0,
            grid=(B, H, T // q_tile),
            in_specs=[
                # Full sequence per batch element; block index is constant over
                # (h, qi), so it is only re-DMA'd when b changes.
                pl.BlockSpec((1, T, d_in), lambda b, h, qi: (b, 0, 0)),
                # Per-head weight blocks -> no non-128-aligned lane slicing.
                pl.BlockSpec((1, d_in, d_out), lambda b, h, qi: (h, 0, 0)),
                pl.BlockSpec((1, d_in, d_out), lambda b, h, qi: (h, 0, 0)),
                pl.BlockSpec((1, d_in, d_out), lambda b, h, qi: (h, 0, 0)),
            ],
            out_specs=pl.BlockSpec((1, 1, q_tile, d_out),
                                   lambda b, h, qi: (b, h, qi, 0)),
            scratch_shapes=[
                pltpu.VMEM((T, d_out), compute_dtype),   # K cache for this (b, h)
                pltpu.VMEM((T, d_out), compute_dtype),   # V cache for this (b, h)
            ],
        ),
        compiler_params=pltpu.CompilerParams(
            # b and h are independent (megacore-shardable on v7x); the query-
            # tile axis reuses the K/V scratch so it must run in order.
            dimension_semantics=("parallel", "parallel", "arbitrary"),
            # Explicit VMEM budget: fits v7x's 32 MiB scoped default
            # (64 MiB physical); v5e/v6e have more headroom.
            vmem_limit_bytes=32 * 1024 * 1024,
        ),
    )(x_c, wq_c, wk_c, wv_c)

    # (B, H, T, d_out) -> (B, T, H*d_out): exactly torch.cat(..., dim=-1) order.
    return out.transpose(0, 2, 1, 3).reshape(B, T, H * d_out)


def _reference(x, wq, wk, wv):
    """Pure-JAX reference mirroring the PyTorch module (eval mode)."""
    outs = []
    d_out = wq.shape[-1]
    T = x.shape[1]
    mask = jnp.triu(jnp.ones((T, T), dtype=bool), k=1)
    for h in range(wq.shape[0]):
        q = x @ wq[h]
        k = x @ wk[h]
        v = x @ wv[h]
        s = jnp.einsum("btd,bsd->bts", q, k) / math.sqrt(d_out)
        s = jnp.where(mask[None], -jnp.inf, s)
        a = jax.nn.softmax(s, axis=-1)
        outs.append(jnp.einsum("bts,bsd->btd", a, v))
    return jnp.concatenate(outs, axis=-1)


if __name__ == "__main__":
    # Module hyperparameters (small; T=16 so the demo exercises 2 query tiles
    # and the multi-KV-tile flash loop):
    B, T = 2, 16               # batch, sequence length (== context_length)
    d_in, d_out = 32, 16       # per-head input / output dims
    num_heads = 2
    # dropout = 0.0, qkv_bias = False  (eval mode)

    key = jax.random.PRNGKey(0)
    kx, kq, kk, kv = jax.random.split(key, 4)

    x = jax.random.normal(kx, (B, T, d_in), dtype=jnp.float32)
    wq = jax.random.normal(kq, (num_heads, d_in, d_out), dtype=jnp.float32) * 0.1
    wk = jax.random.normal(kk, (num_heads, d_in, d_out), dtype=jnp.float32) * 0.1
    wv = jax.random.normal(kv, (num_heads, d_in, d_out), dtype=jnp.float32) * 0.1

    ref = _reference(x, wq, wk, wv)

    # f32 MXU-operand path: tight check (also exercises the tiled causal loop:
    # 2 query tiles x up to 2 KV tiles per head).
    out_f32 = jax.block_until_ready(
        multi_head_attention_wrapper(x, wq, wk, wv, q_tile=8, kv_tile=8,
                                     compute_dtype=jnp.float32))
    assert out_f32.shape == (B, T, num_heads * d_out), out_f32.shape
    assert jnp.allclose(out_f32, ref, atol=5e-3, rtol=5e-3), \
        float(jnp.max(jnp.abs(out_f32 - ref)))

    # bf16 MXU-operand path (recommended on v5e/v6e/v7x): f32 accumulation and
    # f32 softmax; looser tolerance from bf16 operand rounding only.
    out_bf16 = jax.block_until_ready(
        multi_head_attention_wrapper(x, wq, wk, wv, q_tile=8, kv_tile=8,
                                     compute_dtype=jnp.bfloat16))
    assert out_bf16.shape == (B, T, num_heads * d_out), out_bf16.shape
    assert jnp.allclose(out_bf16, ref, atol=5e-2, rtol=5e-2), \
        float(jnp.max(jnp.abs(out_bf16 - ref)))

    print("KERNEL_OK")
</pallas_src>

<mosaic_0001>
module attributes {stable_mosaic.version = 11 : i64} {
  func.func @_mha_head_kernel(%arg0: i32, %arg1: i32, %arg2: i32, %arg3: memref<1x16x32xf32, #tpu.memory_space<vmem>>, %arg4: memref<1x32x16xf32, #tpu.memory_space<vmem>>, %arg5: memref<1x32x16xf32, #tpu.memory_space<vmem>>, %arg6: memref<1x32x16xf32, #tpu.memory_space<vmem>>, %arg7: memref<1x1x8x16xf32, #tpu.memory_space<vmem>>, %arg8: memref<16x16xf32, #tpu.memory_space<vmem>>, %arg9: memref<16x16xf32, #tpu.memory_space<vmem>>) attributes {dimension_semantics = [#tpu.dimension_semantics<parallel>, #tpu.dimension_semantics<parallel>, #tpu.dimension_semantics<arbitrary>], iteration_bounds = array<i64: 2, 2, 2>, scalar_prefetch = 0 : i64, scratch_operands = 2 : i64, tpu.core_type = #tpu.core_type<tc>, window_params = [{transform_indices = @transform_0, window_bounds = array<i64: 1, 16, 32>}, {transform_indices = @transform_1, window_bounds = array<i64: 1, 32, 16>}, {transform_indices = @transform_2, window_bounds = array<i64: 1, 32, 16>}, {transform_indices = @transform_3, window_bounds = array<i64: 1, 32, 16>}, {transform_indices = @transform_4, window_bounds = array<i64: 1, 1, 8, 16>}]} {
    %c0_i32 = arith.constant 0 : i32
    %0 = arith.cmpi eq, %arg2, %c0_i32 : i32
    %1 = arith.extui %0 : i1 to i32
    %c0_i32_0 = arith.constant 0 : i32
    %2 = arith.cmpi ne, %1, %c0_i32_0 : i32
    scf.if %2 {
      %c0_16 = arith.constant 0 : index
      %c0_17 = arith.constant 0 : index
      %c0_18 = arith.constant 0 : index
      %27 = vector.load %arg3[%c0_16, %c0_17, %c0_18] : memref<1x16x32xf32, #tpu.memory_space<vmem>>, vector<1x16x32xf32>
      %28 = vector.shape_cast %27 : vector<1x16x32xf32> to vector<16x32xf32>
      %c0_19 = arith.constant 0 : index
      %c0_20 = arith.constant 0 : index
      %c0_21 = arith.constant 0 : index
      %29 = vector.load %arg5[%c0_19, %c0_20, %c0_21] : memref<1x32x16xf32, #tpu.memory_space<vmem>>, vector<1x32x16xf32>
      %30 = vector.shape_cast %29 : vector<1x32x16xf32> to vector<32x16xf32>
      %cst_22 = arith.constant dense<0.000000e+00> : vector<16x16xf32>
      %31 = tpu.matmul %28, %30, %cst_22 {dimension_numbers = #tpu.dot_dimension_numbers<[1], [0], [0], [1], [0, 0, 1, 1], [], []>} : vector<16x32xf32>, vector<32x16xf32>, vector<16x16xf32> -> vector<16x16xf32>
      %c0_23 = arith.constant 0 : index
      %c0_24 = arith.constant 0 : index
      %32 = vector.load %arg8[%c0_23, %c0_24] : memref<16x16xf32, #tpu.memory_space<vmem>>, vector<16x16xf32>
      tpu.vector_store %arg8[%c0_23, %c0_24], %31 {strides = array<i32>} : memref<16x16xf32, #tpu.memory_space<vmem>>, vector<16x16xf32>,
      %c0_25 = arith.constant 0 : index
      %c0_26 = arith.constant 0 : index
      %c0_27 = arith.constant 0 : index
      %33 = vector.load %arg6[%c0_25, %c0_26, %c0_27] : memref<1x32x16xf32, #tpu.memory_space<vmem>>, vector<1x32x16xf32>
      %34 = vector.shape_cast %33 : vector<1x32x16xf32> to vector<32x16xf32>
      %cst_28 = arith.constant dense<0.000000e+00> : vector<16x16xf32>
      %35 = tpu.matmul %28, %34, %cst_28 {dimension_numbers = #tpu.dot_dimension_numbers<[1], [0], [0], [1], [0, 0, 1, 1], [], []>} : vector<16x32xf32>, vector<32x16xf32>, vector<16x16xf32> -> vector<16x16xf32>
      %c0_29 = arith.constant 0 : index
      %c0_30 = arith.constant 0 : index
      %36 = vector.load %arg9[%c0_29, %c0_30] : memref<16x16xf32, #tpu.memory_space<vmem>>, vector<16x16xf32>
      tpu.vector_store %arg9[%c0_29, %c0_30], %35 {strides = array<i32>} : memref<16x16xf32, #tpu.memory_space<vmem>>, vector<16x16xf32>,
    } else {
    }
    %c8_i32 = arith.constant 8 : i32
    %3 = arith.muli %arg2, %c8_i32 : i32
    %4 = tpu.assume_multiple %3, 8 : i32
    %c0 = arith.constant 0 : index
    %5 = arith.index_cast %4 : i32 to index
    %c0_1 = arith.constant 0 : index
    %6 = vector.load %arg3[%c0, %5, %c0_1] : memref<1x16x32xf32, #tpu.memory_space<vmem>>, vector<1x8x32xf32>
    %7 = vector.shape_cast %6 : vector<1x8x32xf32> to vector<8x32xf32>
    %c0_2 = arith.constant 0 : index
    %c0_3 = arith.constant 0 : index
    %c0_4 = arith.constant 0 : index
    %8 = vector.load %arg4[%c0_2, %c0_3, %c0_4] : memref<1x32x16xf32, #tpu.memory_space<vmem>>, vector<1x32x16xf32>
    %9 = vector.shape_cast %8 : vector<1x32x16xf32> to vector<32x16xf32>
    %cst = arith.constant dense<0.000000e+00> : vector<8x16xf32>
    %10 = tpu.matmul %7, %9, %cst {dimension_numbers = #tpu.dot_dimension_numbers<[1], [0], [0], [1], [0, 0, 1, 1], [], []>} : vector<8x32xf32>, vector<32x16xf32>, vector<8x16xf32> -> vector<8x16xf32>
    %cst_5 = arith.constant 2.500000e-01 : f32
    %11 = vector.broadcast %cst_5 : f32 to vector<8x16xf32>
    %12 = arith.mulf %10, %11 : vector<8x16xf32>
    %c1_i32 = arith.constant 1 : i32
    %13 = arith.addi %arg2, %c1_i32 : i32
    %c1_i32_6 = arith.constant 1 : i32
    %14 = arith.muli %13, %c1_i32_6 : i32
    %cst_7 = arith.constant 0xFF800000 : f32
    %15 = vector.broadcast %cst_7 : f32 to vector<8x1xf32>
    %cst_8 = arith.constant 0.000000e+00 : f32
    %16 = vector.broadcast %cst_8 : f32 to vector<8x1xf32>
    %cst_9 = arith.constant 0.000000e+00 : f32
    %17 = vector.broadcast %cst_9 : f32 to vector<8x16xf32>
    %c0_i32_10 = arith.constant 0 : i32
    %18 = arith.subi %14, %c0_i32_10 : i32
    %19 = arith.addi %c0_i32_10, %18 : i32
    %c1_i32_11 = arith.constant 1 : i32
    %20:3 = scf.for %arg10 = %c0_i32_10 to %19 step %c1_i32_11 iter_args(%arg11 = %15, %arg12 = %16, %arg13 = %17) -> (vector<8x1xf32>, vector<8x1xf32>, vector<8x16xf32>)  : i32 {
      %c8_i32_16 = arith.constant 8 : i32
      %27 = arith.muli %arg10, %c8_i32_16 : i32
      %28 = tpu.assume_multiple %27, 8 : i32
      %29 = arith.index_cast %28 : i32 to index
      %c0_17 = arith.constant 0 : index
      %30 = vector.load %arg8[%29, %c0_17] : memref<16x16xf32, #tpu.memory_space<vmem>>, vector<8x16xf32>
      %31 = arith.index_cast %28 : i32 to index
      %c0_18 = arith.constant 0 : index
      %32 = vector.load %arg9[%31, %c0_18] : memref<16x16xf32, #tpu.memory_space<vmem>>, vector<8x16xf32>
      %cst_19 = arith.constant dense<0.000000e+00> : vector<8x8xf32>
      %33 = tpu.matmul %12, %30, %cst_19 {dimension_numbers = #tpu.dot_dimension_numbers<[1], [1], [0], [0], [0, 0, 1, 0], [], []>} : vector<8x16xf32>, vector<8x16xf32>, vector<8x8xf32> -> vector<8x8xf32>
      %c8_i32_20 = arith.constant 8 : i32
      %34 = arith.muli %arg2, %c8_i32_20 : i32
      %35 = tpu.iota {dimensions = array<i32: 0>} : vector<8x8xi32>
      %36 = vector.broadcast %34 : i32 to vector<8x8xi32>
      %37 = arith.addi %36, %35 : vector<8x8xi32>
      %c8_i32_21 = arith.constant 8 : i32
      %38 = arith.muli %arg10, %c8_i32_21 : i32
      %39 = tpu.iota {dimensions = array<i32: 1>} : vector<8x8xi32>
      %40 = vector.broadcast %38 : i32 to vector<8x8xi32>
      %41 = arith.addi %40, %39 : vector<8x8xi32>
      %42 = arith.cmpi sgt, %41, %37 : vector<8x8xi32>
      %cst_22 = arith.constant -1.000000e+30 : f32
      %43 = vector.broadcast %cst_22 : f32 to vector<8x8xf32>
      %44 = arith.select %42, %43, %33 : vector<8x8xi1>, vector<8x8xf32>
      %cst_23 = arith.constant dense<0xFF800000> : vector<8xf32>
      %45 = vector.multi_reduction <maximumf>, %44, %cst_23 [1] : vector<8x8xf32> to vector<8xf32>
      %46 = vector.shape_cast %45 : vector<8xf32> to vector<8x1xf32>
      %47 = arith.maximumf %arg11, %46 : vector<8x1xf32>
      %48 = arith.subf %arg11, %47 : vector<8x1xf32>
      %49 = math.exp %48 : vector<8x1xf32>
      %50 = vector.broadcast %47 : vector<8x1xf32> to vector<8x8xf32>
      %51 = arith.subf %44, %50 : vector<8x8xf32>
      %52 = math.exp %51 : vector<8x8xf32>
      %53 = arith.mulf %49, %arg12 : vector<8x1xf32>
      %cst_24 = arith.constant dense<0.000000e+00> : vector<8xf32>
      %54 = vector.multi_reduction <add>, %52, %cst_24 [1] : vector<8x8xf32> to vector<8xf32>
      %55 = vector.shape_cast %54 : vector<8xf32> to vector<8x1xf32>
      %56 = arith.addf %53, %55 : vector<8x1xf32>
      %57 = vector.broadcast %49 : vector<8x1xf32> to vector<8x16xf32>
      %58 = arith.mulf %57, %arg13 : vector<8x16xf32>
      %cst_25 = arith.constant dense<0.000000e+00> : vector<8x16xf32>
      %59 = tpu.matmul %52, %32, %cst_25 {dimension_numbers = #tpu.dot_dimension_numbers<[1], [0], [0], [1], [0, 0, 1, 1], [], []>} : vector<8x8xf32>, vector<8x16xf32>, vector<8x16xf32> -> vector<8x16xf32>
      %60 = arith.addf %58, %59 : vector<8x16xf32>
      scf.yield %47, %56, %60 : vector<8x1xf32>, vector<8x1xf32>, vector<8x16xf32>
    }
    %21 = tpu.reciprocal %20#1 : vector<8x1xf32> -> vector<8x1xf32>
    %22 = vector.broadcast %21 : vector<8x1xf32> to vector<8x16xf32>
    %23 = arith.mulf %20#2, %22 : vector<8x16xf32>
    %c0_12 = arith.constant 0 : index
    %c0_13 = arith.constant 0 : index
    %c0_14 = arith.constant 0 : index
    %c0_15 = arith.constant 0 : index
    %24 = vector.load %arg7[%c0_12, %c0_13, %c0_14, %c0_15] : memref<1x1x8x16xf32, #tpu.memory_space<vmem>>, vector<1x1x8x16xf32>
    %25 = vector.shape_cast %24 : vector<1x1x8x16xf32> to vector<8x16xf32>
    %26 = vector.shape_cast %23 : vector<8x16xf32> to vector<1x1x8x16xf32>
    tpu.vector_store %arg7[%c0_12, %c0_13, %c0_14, %c0_15], %26 {strides = array<i32>} : memref<1x1x8x16xf32, #tpu.memory_space<vmem>>, vector<1x1x8x16xf32>,
    return
  }
  func.func @transform_0(%arg0: i32, %arg1: i32, %arg2: i32) -> (i32, i32, i32) {
    %c0_i32 = arith.constant 0 : i32
    %c0_i32_0 = arith.constant 0 : i32
    %c0_i32_1 = arith.constant 0 : i32
    return %arg0, %c0_i32, %c0_i32_0 : i32, i32, i32
  }
  func.func @transform_1(%arg0: i32, %arg1: i32, %arg2: i32) -> (i32, i32, i32) {
    %c0_i32 = arith.constant 0 : i32
    %c0_i32_0 = arith.constant 0 : i32
    %c0_i32_1 = arith.constant 0 : i32
    return %arg1, %c0_i32, %c0_i32_0 : i32, i32, i32
  }
  func.func @transform_2(%arg0: i32, %arg1: i32, %arg2: i32) -> (i32, i32, i32) {
    %c0_i32 = arith.constant 0 : i32
    %c0_i32_0 = arith.constant 0 : i32
    %c0_i32_1 = arith.constant 0 : i32
    return %arg1, %c0_i32, %c0_i32_0 : i32, i32, i32
  }
  func.func @transform_3(%arg0: i32, %arg1: i32, %arg2: i32) -> (i32, i32, i32) {
    %c0_i32 = arith.constant 0 : i32
    %c0_i32_0 = arith.constant 0 : i32
    %c0_i32_1 = arith.constant 0 : i32
    return %arg1, %c0_i32, %c0_i32_0 : i32, i32, i32
  }
  func.func @transform_4(%arg0: i32, %arg1: i32, %arg2: i32) -> (i32, i32, i32, i32) {
    %c0_i32 = arith.constant 0 : i32
    %c0_i32_0 = arith.constant 0 : i32
    return %arg0, %arg1, %arg2, %c0_i32 : i32, i32, i32, i32
  }
}

</mosaic_0001>

<llo_original>
// kernel: tpu_custom_call.1
$region0: #{tpu_custom_call.1}
  #allocation0 [shape = 'u32[]', space=smem, size = 0x4, offset = 0x4, fixed_abs, tag = 'smem constant byte address 0x4 - core index']
  #allocation1 [shape = 'u32[144,128]{1,0:T(1,128)}', space=vmem, size = 0x12000, scoped, tag = 'internal scratch']
  #allocation2 [shape = 'f32[16,16]{1,0:T(8,128)}', space=vmem, size = 0x2000, scoped, tag = 'scratch operand']
  #allocation3 [shape = 'f32[16,16]{1,0:T(8,128)}', space=vmem, size = 0x2000, scoped, tag = 'scratch operand']
  %s0 = inlined_call_operand.vmem [shape: f32[2,16,32], index: 0, kind: input, shape index: {}]
  %s1 = inlined_call_operand.vmem [shape: f32[2,32,16], index: 1, kind: input, shape index: {}]
  %s2 = inlined_call_operand.vmem [shape: f32[2,32,16], index: 2, kind: input, shape index: {}]
  %s3 = inlined_call_operand.vmem [shape: f32[2,32,16], index: 3, kind: input, shape index: {}]
  %s4 = inlined_call_operand.hbm [shape: f32[2,2,16,16], index: 4, kind: output, shape index: {}]
  %s5 = sld [smem:[#allocation0]]
  $region60: #{tpu_custom_call.1} parent=0
    _
  %s7 = ssub.s32 1, %s5
  %s8 = scalar_select 0, %s7, %s5
  $region1: #{tpu_custom_call.1} parent=0
    #allocation4 [shape = 'u8[8192]{0}', space=vmem, size = 0x2000, scoped, tag = 'output window, operand 0']
    #allocation5 [shape = 's32[2]{0}', space=sflag, size = 0x8, scoped, tag = 'scoped memory for tpu_custom_call.1']
    %9 = vsyncpa [#allocation5], 0
    %s10 = scalar_lea.sflag [#allocation5], 1
    %11 = vsyncpa %s10, 0
    loop: start=0, step=1, limit=10
    $region2: #{tpu_custom_call.1} parent=1 // loop_pre_header
      _
    $region3: #{tpu_custom_call.1} parent=1 // loop_header
      %s13 = sphi 0, %s17
      %p14 = scmp.ge.s32.totalorder %s13, 10
      %s20 = sphi 0, %s39
      %s21 = sphi 0, %s35
      %s22 = sphi 0, %s31
      %s23 = sphi 0, %s20
      %s24 = sphi 0, %s21
      %s25 = sphi 0, %s22
      %s26 = sphi 0, %s23
      %s27 = sphi 0, %s24
      %s28 = sphi 0, %s25
      %s42 = sphi 0, %s44
      %s45 = sphi 0, %s42
      %s46 = sphi 0, %s45
      %s62 = sphi 0, %s46
      %s68 = sphi 0, %s70
      %s71 = sphi 0, %s68
      %s72 = sphi 0, %s71
      %s88 = sphi 0, %s72
      %s94 = sphi 0, %s96
      %s97 = sphi 0, %s94
      %s98 = sphi 0, %s97
      %s114 = sphi 0, %s98
      %s120 = sphi 0, %s122
      %s123 = sphi 0, %s120
      %s124 = sphi 0, %s123
      %s140 = sphi 0, %s124
      %s150 = sphi 0, %s152
      %s153 = sphi 0, %s150
      %s154 = sphi 0, %s153
      %s170 = sphi 0, %s154
    $region4: #{tpu_custom_call.1} parent=1 // loop_header_branch
      %16 = sbr.rel (%p14) target = $region8
    $region5: #{tpu_custom_call.1} parent=1 // loop_body
      %s18 = ssub.s32 %s13, 1
      %s19 = ssub.s32 %s13, 2
      %s29 = sadd.s32 1, %s22
      %p30 = scmp.ge.s32.totalorder %s29, 2
      %s31 = scalar_select %p30, 0, %s29
      %s32 = sadd.s32 1, %s21
      %s33 = scalar_select %p30, %s32, %s21
      %p34 = scmp.ge.s32.totalorder %s33, 2
      %s35 = scalar_select %p34, 0, %s33
      %s36 = sadd.s32 1, %s20
      %s37 = scalar_select %p34, %s36, %s20
      %p38 = scmp.ge.s32.totalorder %s37, 2
      %s39 = scalar_select %p38, 0, %s37
      %s40 = ssub.s32 %s20, %s39
      %p41 = scmp.eq.s32.totalorder %s40, 0
      %s43 = sadd.s32 %s42, 1
      %s44 = scalar_select %p41, %s42, %s43
      %p47 = pneg %p41
      %p48 = scmp.eq.s32.totalorder %s13, 7
      %p49 = por %p47, %p48
      %p50 = scmp.ne.s32.totalorder %s42, %s45
      %p51 = scmp.eq.s32.totalorder %s13, 0
      %p52 = por %p50, %p51
      %p53 = scmp.ne.s32.totalorder %s42, %s45
      %p54 = scmp.eq.s32.totalorder %s18, 7
      %p55 = por %p53, %p54
      %p56 = scmp.ne.s32.totalorder %s45, %s46
      %p57 = scmp.eq.s32.totalorder %s18, 0
      %p58 = por %p56, %p57
      %p59 = scmp.ne.s32.totalorder %s45, %s46
      %p60 = scmp.eq.s32.totalorder %s19, 7
      %p61 = por %p59, %p60
      %p63 = scmp.ne.s32.totalorder %s46, %s62
      %p64 = scmp.eq.s32.totalorder %s19, 0
      %p65 = por %p63, %p64
      %s66 = ssub.s32 %s21, %s35
      %p67 = scmp.eq.s32.totalorder %s66, 0
      %s69 = sadd.s32 %s68, 1
      %s70 = scalar_select %p67, %s68, %s69
      %p73 = pneg %p67
      %p74 = scmp.eq.s32.totalorder %s13, 7
      %p75 = por %p73, %p74
      %p76 = scmp.ne.s32.totalorder %s68, %s71
      %p77 = scmp.eq.s32.totalorder %s13, 0
      %p78 = por %p76, %p77
      %p79 = scmp.ne.s32.totalorder %s68, %s71
      %p80 = scmp.eq.s32.totalorder %s18, 7
      %p81 = por %p79, %p80
      %p82 = scmp.ne.s32.totalorder %s71, %s72
      %p83 = scmp.eq.s32.totalorder %s18, 0
      %p84 = por %p82, %p83
      %p85 = scmp.ne.s32.totalorder %s71, %s72
      %p86 = scmp.eq.s32.totalorder %s19, 7
      %p87 = por %p85, %p86
      %p89 = scmp.ne.s32.totalorder %s72, %s88
      %p90 = scmp.eq.s32.totalorder %s19, 0
      %p91 = por %p89, %p90
      %s92 = ssub.s32 %s21, %s35
      %p93 = scmp.eq.s32.totalorder %s92, 0
      %s95 = sadd.s32 %s94, 1
      %s96 = scalar_select %p93, %s94, %s95
      %p99 = pneg %p93
      %p100 = scmp.eq.s32.totalorder %s13, 7
      %p101 = por %p99, %p100
      %p102 = scmp.ne.s32.totalorder %s94, %s97
      %p103 = scmp.eq.s32.totalorder %s13, 0
      %p104 = por %p102, %p103
      %p105 = scmp.ne.s32.totalorder %s94, %s97
      %p106 = scmp.eq.s32.totalorder %s18, 7
      %p107 = por %p105, %p106
      %p108 = scmp.ne.s32.totalorder %s97, %s98
      %p109 = scmp.eq.s32.totalorder %s18, 0
      %p110 = por %p108, %p109
      %p111 = scmp.ne.s32.totalorder %s97, %s98
      %p112 = scmp.eq.s32.totalorder %s19, 7
      %p113 = por %p111, %p112
      %p115 = scmp.ne.s32.totalorder %s98, %s114
      %p116 = scmp.eq.s32.totalorder %s19, 0
      %p117 = por %p115, %p116
      %s118 = ssub.s32 %s21, %s35
      %p119 = scmp.eq.s32.totalorder %s118, 0
      %s121 = sadd.s32 %s120, 1
      %s122 = scalar_select %p119, %s120, %s121
      %p125 = pneg %p119
      %p126 = scmp.eq.s32.totalorder %s13, 7
      %p127 = por %p125, %p126
      %p128 = scmp.ne.s32.totalorder %s120, %s123
      %p129 = scmp.eq.s32.totalorder %s13, 0
      %p130 = por %p128, %p129
      %p131 = scmp.ne.s32.totalorder %s120, %s123
      %p132 = scmp.eq.s32.totalorder %s18, 7
      %p133 = por %p131, %p132
      %p134 = scmp.ne.s32.totalorder %s123, %s124
      %p135 = scmp.eq.s32.totalorder %s18, 0
      %p136 = por %p134, %p135
      %p137 = scmp.ne.s32.totalorder %s123, %s124
      %p138 = scmp.eq.s32.totalorder %s19, 7
      %p139 = por %p137, %p138
      %p141 = scmp.ne.s32.totalorder %s124, %s140
      %p142 = scmp.eq.s32.totalorder %s19, 0
      %p143 = por %p141, %p142
      %s144 = ssub.s32 %s20, %s39
      %s145 = ssub.s32 %s21, %s35
      %s146 = sor.u32 %s144, %s145
      %s147 = ssub.s32 %s22, %s31
      %s148 = sor.u32 %s146, %s147
      %p149 = scmp.eq.s32.totalorder %s148, 0
      %s151 = sadd.s32 %s150, 1
      %s152 = scalar_select %p149, %s150, %s151
      %p155 = pneg %p149
      %p156 = scmp.eq.s32.totalorder %s13, 7
      %p157 = por %p155, %p156
      %p158 = scmp.ne.s32.totalorder %s150, %s153
      %p159 = scmp.eq.s32.totalorder %s13, 0
      %p160 = por %p158, %p159
      %p161 = scmp.ne.s32.totalorder %s150, %s153
      %p162 = scmp.eq.s32.totalorder %s18, 7
      %p163 = por %p161, %p162
      %p164 = scmp.ne.s32.totalorder %s153, %s154
      %p165 = scmp.eq.s32.totalorder %s18, 0
      %p166 = por %p164, %p165
      %p167 = scmp.ne.s32.totalorder %s153, %s154
      %p168 = scmp.eq.s32.totalorder %s19, 7
      %p169 = por %p167, %p168
      %p171 = scmp.ne.s32.totalorder %s154, %s170
      %p172 = scmp.eq.s32.totalorder %s19, 0
      %p173 = por %p171, %p172
      %p174 = scmp.le.s32.totalorder 1, %s13
      %p175 = scmp.lt.s32.totalorder %s13, 9
      %p176 = pnand %p174, %p175
      %p177 = pneg %p176
      // Predicated region
      $region9: #{tpu_custom_call.1} parent=5 // pred_check
        _
      $region10: #{tpu_custom_call.1} parent=5 // pred_check_branch
        %179 = sbr.rel (%p176) target = $region12
      $region11: #{tpu_custom_call.1} parent=5 // pred_region
        %s180 = ssub.s32 %s13, 1
      $region12: #{tpu_custom_call.1} parent=5 // pred_fallthru
        _
      %p181 = scmp.lt.s32.totalorder %s13, 8
      // Predicated region
      $region13: #{tpu_custom_call.1} parent=5 // pred_check
        %p182 = pneg %p181
      $region14: #{tpu_custom_call.1} parent=5 // pred_check_branch
        %184 = sbr.rel (%p182) target = $region16
      $region15: #{tpu_custom_call.1} parent=5 // pred_region
        // Predicated region
        $region17: #{tpu_custom_call.1} parent=15 // pred_check
          %p185 = pneg %p52
        $region18: #{tpu_custom_call.1} parent=15 // pred_check_branch
          %187 = sbr.rel (%p185) target = $region20
        $region19: #{tpu_custom_call.1} parent=15 // pred_region
          %p188 = scmp.lt.s32.totalorder %s20, 1
          %s189 = scalar_select %p188, %s20, 1
          %s190 = smul.addr %s189, 2
          %s191 = smul.addr %s190, 8
          %s192 = scalar_lea.vmem %s0, %s191
        $region20: #{tpu_custom_call.1} parent=15 // pred_fallthru
          _
        // Predicated region
        $region21: #{tpu_custom_call.1} parent=15 // pred_check
          %p193 = pneg %p78
        $region22: #{tpu_custom_call.1} parent=15 // pred_check_branch
          %195 = sbr.rel (%p193) target = $region24
        $region23: #{tpu_custom_call.1} parent=15 // pred_region
          %p196 = scmp.lt.s32.totalorder %s21, 1
          %s197 = scalar_select %p196, %s21, 1
          %s198 = smul.addr %s197, 4
          %s199 = smul.addr %s198, 8
          %s200 = scalar_lea.vmem %s1, %s199
        $region24: #{tpu_custom_call.1} parent=15 // pred_fallthru
          _
        // Predicated region
        $region25: #{tpu_custom_call.1} parent=15 // pred_check
          %p201 = pneg %p104
        $region26: #{tpu_custom_call.1} parent=15 // pred_check_branch
          %203 = sbr.rel (%p201) target = $region28
        $region27: #{tpu_custom_call.1} parent=15 // pred_region
          %p204 = scmp.lt.s32.totalorder %s21, 1
          %s205 = scalar_select %p204, %s21, 1
          %s206 = smul.addr %s205, 4
          %s207 = smul.addr %s206, 8
          %s208 = scalar_lea.vmem %s2, %s207
        $region28: #{tpu_custom_call.1} parent=15 // pred_fallthru
          _
        // Predicated region
        $region29: #{tpu_custom_call.1} parent=15 // pred_check
          %p209 = pneg %p130
        $region30: #{tpu_custom_call.1} parent=15 // pred_check_branch
          %211 = sbr.rel (%p209) target = $region32
        $region31: #{tpu_custom_call.1} parent=15 // pred_region
          %p212 = scmp.lt.s32.totalorder %s21, 1
          %s213 = scalar_select %p212, %s21, 1
          %s214 = smul.addr %s213, 4
          %s215 = smul.addr %s214, 8
          %s216 = scalar_lea.vmem %s3, %s215
        $region32: #{tpu_custom_call.1} parent=15 // pred_fallthru
          _
      $region16: #{tpu_custom_call.1} parent=5 // pred_fallthru
        _
      %p217 = scmp.le.s32.totalorder 1, %s13
      %p218 = scmp.lt.s32.totalorder %s13, 9
      %p219 = pnand %p217, %p218
      %p220 = pneg %p219
      // Predicated region
      $region33: #{tpu_custom_call.1} parent=5 // pred_check
        _
      $region34: #{tpu_custom_call.1} parent=5 // pred_check_branch
        %222 = sbr.rel (%p219) target = $region36
      $region35: #{tpu_custom_call.1} parent=5 // pred_region
        %s223 = ssub.s32 %s13, 1
        %p224 = scmp.lt.s32.totalorder %s23, 1
        %s225 = scalar_select %p224, %s23, 1
        %s226 = smul.addr %s225, 2
        %s227 = smul.addr %s226, 8
        %s228 = scalar_lea.vmem %s0, %s227
        %p229 = pneg %p58
        %p230 = pneg %p55
        %p231 = scmp.lt.s32.totalorder %s24, 1
        %s232 = scalar_select %p231, %s24, 1
        %s233 = smul.addr %s232, 4
        %s234 = smul.addr %s233, 8
        %s235 = scalar_lea.vmem %s1, %s234
        %p236 = pneg %p84
        %p237 = pneg %p81
        %p238 = scmp.lt.s32.totalorder %s24, 1
        %s239 = scalar_select %p238, %s24, 1
        %s240 = smul.addr %s239, 4
        %s241 = smul.addr %s240, 8
        %s242 = scalar_lea.vmem %s2, %s241
        %p243 = pneg %p110
        %p244 = pneg %p107
        %p245 = scmp.lt.s32.totalorder %s24, 1
        %s246 = scalar_select %p245, %s24, 1
        %s247 = smul.addr %s246, 4
        %s248 = smul.addr %s247, 8
        %s249 = scalar_lea.vmem %s3, %s248
        %p250 = pneg %p136
        %p251 = pneg %p133
        %p252 = pneg %p166
        %p253 = pneg %p163
        %s254 = sand.u32 %s153, 1
        %s255 = scalar_lea.sflag [#allocation5], %s254
        %s256 = sand.u32 %s153, 1
        %s257 = smul.addr %s256, 8
        %s258 = scalar_lea.vmem [#allocation4], %s257
        %p259 = scmp.lt.s32.totalorder %s23, 1
        %s260 = scalar_select %p259, %s23, 1
        %s261 = smul.addr %s260, 2
        %s262 = smul.addr %s261, 8
        %s263 = scalar_lea.vmem %s0, %s262
        %p264 = scmp.lt.s32.totalorder %s24, 1
        %s265 = scalar_select %p264, %s24, 1
        %s266 = smul.addr %s265, 4
        %s267 = smul.addr %s266, 8
        %s268 = scalar_lea.vmem %s1, %s267
        %p269 = scmp.lt.s32.totalorder %s24, 1
        %s270 = scalar_select %p269, %s24, 1
        %s271 = smul.addr %s270, 4
        %s272 = smul.addr %s271, 8
        %s273 = scalar_lea.vmem %s2, %s272
        %p274 = scmp.lt.s32.totalorder %s24, 1
        %s275 = scalar_select %p274, %s24, 1
        %s276 = smul.addr %s275, 4
        %s277 = smul.addr %s276, 8
        %s278 = scalar_lea.vmem %s3, %s277
        %p279 = scmp.eq.s32.totalorder %s25, 0
        // Predicated region
        $region37: #{tpu_custom_call.1} parent=35 // pred_check
          %p280 = pneg %p279
        $region38: #{tpu_custom_call.1} parent=35 // pred_check_branch
          %282 = sbr.rel (%p280) target = $region40
        $region39: #{tpu_custom_call.1} parent=35 // pred_region
          %v283 = vld [vmem:[%s263] sm:$0xff]
          %v284 = vld [vmem:[%s263 + $0x8] sm:$0xff]
          %v285 = vld [vmem:[%s273] sm:$0xff]
          %v286 = vld [vmem:[%s273 + $0x8] sm:$0xff]
          %v287 = vld [vmem:[%s273 + $0x10] sm:$0xff]
          %v288 = vld [vmem:[%s273 + $0x18] sm:$0xff]
          %vm289 = vcmask 261120
          %v291 = vsel %vm289, %v283, 0
          %v294 = vsel %vm289, %v284, 0
          %296 = vmatprep.subr.mxu0 0.0
          %297 = vmatpush1.msra.mxu0 %v285
          %298 = vmatprep.subr.mxu0 0.0
          %299 = vmatpush1.msra.mxu0 %v286
          %300 = vmatprep.subr.mxu0 0.0
          %301 = vmatpush1.msra.mxu0 %v287
          %302 = vmatprep.subr.mxu0 0.0
          %303 = vmatpush1.msra.mxu0 %v288
          %304 = vmatprep.subr.mxu0 0.0
          %305 = vmatpush1.msra.mxu0 0.0
          %306 = vmatprep.subr.mxu0 0.0
          %307 = vmatpush1.msra.mxu0 0.0
          %308 = vmatprep.subr.mxu0 0.0
          %309 = vmatpush1.msra.mxu0 0.0
          %310 = vmatprep.subr.mxu0 0.0
          %311 = vmatpush1.msra.mxu0 0.0
          %312 = vmatprep.subr.mxu0 0.0
          %313 = vmatpush1.msra.mxu0 0.0
          %314 = vmatprep.subr.mxu0 0.0
          %315 = vmatpush1.msra.mxu0 0.0
          %316 = vmatprep.subr.mxu0 0.0
          %317 = vmatpush1.msra.mxu0 0.0
          %318 = vmatprep.subr.mxu0 0.0
          %319 = vmatpush1.msra.mxu0 0.0
          %320 = vmatprep.subr.mxu0 0.0
          %321 = vmatpush1.msra.mxu0 0.0
          %322 = vmatprep.subr.mxu0 0.0
          %323 = vmatpush1.msra.mxu0 0.0
          %324 = vmatprep.subr.mxu0 0.0
          %325 = vmatpush1.msra.mxu0 0.0
          %326 = vmatprep.subr.mxu0 0.0
          %327 = vmatpush1.msra.mxu0 0.0
          %328 = vmatprep.subr.mxu0 0.0
          %329 = vmatpush1.msra.mxu0 0.0
          %330 = vmatprep.subr.mxu0 0.0
          %331 = vmatpush1.msra.mxu0 0.0
          %332 = vmatprep.subr.mxu0 0.0
          %333 = vmatpush1.msra.mxu0 0.0
          %334 = vmatprep.subr.mxu0 0.0
          %335 = vmatpush1.msra.mxu0 0.0
          %336 = vmatprep.subr.mxu0 0.0
          %337 = vmatpush1.msra.mxu0 0.0
          %338 = vmatprep.subr.mxu0 0.0
          %339 = vmatpush1.msra.mxu0 0.0
          %340 = vmatprep.subr.mxu0 0.0
          %341 = vmatpush1.msra.mxu0 0.0
          %342 = vmatprep.subr.mxu0 0.0
          %343 = vmatpush1.msra.mxu0 0.0
          %344 = vmatprep.subr.mxu0 0.0
          %345 = vmatpush1.msra.mxu0 0.0
          %346 = vmatprep.subr.mxu0 0.0
          %347 = vmatpush1.msra.mxu0 0.0
          %348 = vmatprep.subr.mxu0 0.0
          %349 = vmatpush1.msra.mxu0 0.0
          %350 = vmatprep.subr.mxu0 0.0
          %351 = vmatpush1.msra.mxu0 0.0
          %352 = vmatprep.subr.mxu0 0.0
          %353 = vmatpush1.msra.mxu0 0.0
          %354 = vmatprep.subr.mxu0 0.0
          %355 = vmatpush1.msra.mxu0 0.0
          %356 = vmatprep.subr.mxu0 0.0
          %357 = vmatpush1.msra.mxu0 0.0
          %358 = vmatprep.subr.mxu0 0.0
          %359 = vmatpush1.msra.mxu0 0.0
          %360 = vmatprep.mubr.f32.mxu0 0.0
          %361 = vmatmul.mubr.f32.gmra.mrb[0].mxu0 %v291
          %v362 = vpop.f32.mrb[0].mxu0
          %v363 = vadd.f32 0.0, %v362
          %v364 = vpop.f32.mrb[0].mxu0
          %365 = vmatprep.mubr.f32.mxu0 0.0
          %366 = vmatmul.mubr.f32.gmra.mrb[0].mxu0 %v294
          %v367 = vpop.f32.mrb[0].mxu0
          %v368 = vadd.f32 0.0, %v367
          %v369 = vpop.f32.mrb[0].mxu0
          %370 = vdwg.mxu0
          %vm371 = vcmask 130048
          %372 = vst.msk [vmem:[#allocation2] sm:$0xff] %vm371, %v363
          %373 = vst.msk [vmem:[#allocation2 + $0x8] sm:$0xff] %vm371, %v368
          %v374 = vld [vmem:[%s278] sm:$0xff]
          %v375 = vld [vmem:[%s278 + $0x8] sm:$0xff]
          %v376 = vld [vmem:[%s278 + $0x10] sm:$0xff]
          %v377 = vld [vmem:[%s278 + $0x18] sm:$0xff]
          %378 = vmatprep.subr.mxu0 0.0
          %379 = vmatpush1.msra.mxu0 %v374
          %380 = vmatprep.subr.mxu0 0.0
          %381 = vmatpush1.msra.mxu0 %v375
          %382 = vmatprep.subr.mxu0 0.0
          %383 = vmatpush1.msra.mxu0 %v376
          %384 = vmatprep.subr.mxu0 0.0
          %385 = vmatpush1.msra.mxu0 %v377
          %386 = vmatprep.subr.mxu0 0.0
          %387 = vmatpush1.msra.mxu0 0.0
          %388 = vmatprep.subr.mxu0 0.0
          %389 = vmatpush1.msra.mxu0 0.0
          %390 = vmatprep.subr.mxu0 0.0
          %391 = vmatpush1.msra.mxu0 0.0
          %392 = vmatprep.subr.mxu0 0.0
          %393 = vmatpush1.msra.mxu0 0.0
          %394 = vmatprep.subr.mxu0 0.0
          %395 = vmatpush1.msra.mxu0 0.0
          %396 = vmatprep.subr.mxu0 0.0
          %397 = vmatpush1.msra.mxu0 0.0
          %398 = vmatprep.subr.mxu0 0.0
          %399 = vmatpush1.msra.mxu0 0.0
          %400 = vmatprep.subr.mxu0 0.0
          %401 = vmatpush1.msra.mxu0 0.0
          %402 = vmatprep.subr.mxu0 0.0
          %403 = vmatpush1.msra.mxu0 0.0
          %404 = vmatprep.subr.mxu0 0.0
          %405 = vmatpush1.msra.mxu0 0.0
          %406 = vmatprep.subr.mxu0 0.0
          %407 = vmatpush1.msra.mxu0 0.0
          %408 = vmatprep.subr.mxu0 0.0
          %409 = vmatpush1.msra.mxu0 0.0
          %410 = vmatprep.subr.mxu0 0.0
          %411 = vmatpush1.msra.mxu0 0.0
          %412 = vmatprep.subr.mxu0 0.0
          %413 = vmatpush1.msra.mxu0 0.0
          %414 = vmatprep.subr.mxu0 0.0
          %415 = vmatpush1.msra.mxu0 0.0
          %416 = vmatprep.subr.mxu0 0.0
          %417 = vmatpush1.msra.mxu0 0.0
          %418 = vmatprep.subr.mxu0 0.0
          %419 = vmatpush1.msra.mxu0 0.0
          %420 = vmatprep.subr.mxu0 0.0
          %421 = vmatpush1.msra.mxu0 0.0
          %422 = vmatprep.subr.mxu0 0.0
          %423 = vmatpush1.msra.mxu0 0.0
          %424 = vmatprep.subr.mxu0 0.0
          %425 = vmatpush1.msra.mxu0 0.0
          %426 = vmatprep.subr.mxu0 0.0
          %427 = vmatpush1.msra.mxu0 0.0
          %428 = vmatprep.subr.mxu0 0.0
          %429 = vmatpush1.msra.mxu0 0.0
          %430 = vmatprep.subr.mxu0 0.0
          %431 = vmatpush1.msra.mxu0 0.0
          %432 = vmatprep.subr.mxu0 0.0
          %433 = vmatpush1.msra.mxu0 0.0
          %434 = vmatprep.subr.mxu0 0.0
          %435 = vmatpush1.msra.mxu0 0.0
          %436 = vmatprep.subr.mxu0 0.0
          %437 = vmatpush1.msra.mxu0 0.0
          %438 = vmatprep.subr.mxu0 0.0
          %439 = vmatpush1.msra.mxu0 0.0
          %440 = vmatprep.subr.mxu0 0.0
          %441 = vmatpush1.msra.mxu0 0.0
          %442 = vmatprep.mubr.f32.mxu0 0.0
          %443 = vmatmul.mubr.f32.gmra.mrb[0].mxu0 %v291
          %v444 = vpop.f32.mrb[0].mxu0
          %v445 = vadd.f32 0.0, %v444
          %v446 = vpop.f32.mrb[0].mxu0
          %447 = vmatprep.mubr.f32.mxu0 0.0
          %448 = vmatmul.mubr.f32.gmra.mrb[0].mxu0 %v294
          %v449 = vpop.f32.mrb[0].mxu0
          %v450 = vadd.f32 0.0, %v449
          %v451 = vpop.f32.mrb[0].mxu0
          %452 = vdwg.mxu0
          %453 = vst.msk [vmem:[#allocation3] sm:$0xff] %vm371, %v445
          %454 = vst.msk [vmem:[#allocation3 + $0x8] sm:$0xff] %vm371, %v450
        $region40: #{tpu_custom_call.1} parent=35 // pred_fallthru
          _
        %s455 = smul.u32 %s25, 8
        %s456 = scalar_lea.vmem %s263, %s455
        %v457 = vld [vmem:[%s456] sm:$0xff]
        %v458 = vld [vmem:[%s268] sm:$0xff]
        %v459 = vld [vmem:[%s268 + $0x8] sm:$0xff]
        %v460 = vld [vmem:[%s268 + $0x10] sm:$0xff]
        %v461 = vld [vmem:[%s268 + $0x18] sm:$0xff]
        %vm462 = vcmask 261120
        %v464 = vsel %vm462, %v457, 0
        %466 = vmatprep.subr.mxu0 0.0
        %467 = vmatpush1.msra.mxu0 %v458
        %468 = vmatprep.subr.mxu0 0.0
        %469 = vmatpush1.msra.mxu0 %v459
        %470 = vmatprep.subr.mxu0 0.0
        %471 = vmatpush1.msra.mxu0 %v460
        %472 = vmatprep.subr.mxu0 0.0
        %473 = vmatpush1.msra.mxu0 %v461
        %474 = vmatprep.subr.mxu0 0.0
        %475 = vmatpush1.msra.mxu0 0.0
        %476 = vmatprep.subr.mxu0 0.0
        %477 = vmatpush1.msra.mxu0 0.0
        %478 = vmatprep.subr.mxu0 0.0
        %479 = vmatpush1.msra.mxu0 0.0
        %480 = vmatprep.subr.mxu0 0.0
        %481 = vmatpush1.msra.mxu0 0.0
        %482 = vmatprep.subr.mxu0 0.0
        %483 = vmatpush1.msra.mxu0 0.0
        %484 = vmatprep.subr.mxu0 0.0
        %485 = vmatpush1.msra.mxu0 0.0
        %486 = vmatprep.subr.mxu0 0.0
        %487 = vmatpush1.msra.mxu0 0.0
        %488 = vmatprep.subr.mxu0 0.0
        %489 = vmatpush1.msra.mxu0 0.0
        %490 = vmatprep.subr.mxu0 0.0
        %491 = vmatpush1.msra.mxu0 0.0
        %492 = vmatprep.subr.mxu0 0.0
        %493 = vmatpush1.msra.mxu0 0.0
        %494 = vmatprep.subr.mxu0 0.0
        %495 = vmatpush1.msra.mxu0 0.0
        %496 = vmatprep.subr.mxu0 0.0
        %497 = vmatpush1.msra.mxu0 0.0
        %498 = vmatprep.subr.mxu0 0.0
        %499 = vmatpush1.msra.mxu0 0.0
        %500 = vmatprep.subr.mxu0 0.0
        %501 = vmatpush1.msra.mxu0 0.0
        %502 = vmatprep.subr.mxu0 0.0
        %503 = vmatpush1.msra.mxu0 0.0
        %504 = vmatprep.subr.mxu0 0.0
        %505 = vmatpush1.msra.mxu0 0.0
        %506 = vmatprep.subr.mxu0 0.0
        %507 = vmatpush1.msra.mxu0 0.0
        %508 = vmatprep.subr.mxu0 0.0
        %509 = vmatpush1.msra.mxu0 0.0
        %510 = vmatprep.subr.mxu0 0.0
        %511 = vmatpush1.msra.mxu0 0.0
        %512 = vmatprep.subr.mxu0 0.0
        %513 = vmatpush1.msra.mxu0 0.0
        %514 = vmatprep.subr.mxu0 0.0
        %515 = vmatpush1.msra.mxu0 0.0
        %516 = vmatprep.subr.mxu0 0.0
        %517 = vmatpush1.msra.mxu0 0.0
        %518 = vmatprep.subr.mxu0 0.0
        %519 = vmatpush1.msra.mxu0 0.0
        %520 = vmatprep.subr.mxu0 0.0
        %521 = vmatpush1.msra.mxu0 0.0
        %522 = vmatprep.subr.mxu0 0.0
        %523 = vmatpush1.msra.mxu0 0.0
        %524 = vmatprep.subr.mxu0 0.0
        %525 = vmatpush1.msra.mxu0 0.0
        %526 = vmatprep.subr.mxu0 0.0
        %527 = vmatpush1.msra.mxu0 0.0
        %528 = vmatprep.subr.mxu0 0.0
        %529 = vmatpush1.msra.mxu0 0.0
        %530 = vmatprep.mubr.f32.mxu0 0.0
        %531 = vmatmul.mubr.f32.gmra.mrb[0].mxu0 %v464
        %v532 = vpop.f32.mrb[0].mxu0
        %v533 = vadd.f32 0.0, %v532
        %v534 = vpop.f32.mrb[0].mxu0
        %535 = vdwg.mxu0
        %v536 = vmul.f32 %v533, 0.25
        %s537 = sadd.s32 %s25, 1
        // While loop
        $region41: #{tpu_custom_call.1} parent=35 // loop_pre_header
          _
        $region42: #{tpu_custom_call.1} parent=35 // loop_header
          %s539 = sphi 0, %s541
          %p540 = scmp.ge.s32.totalorder %s539, %s537
          %v544 = vphi -inf, %v643
          %v545 = vphi 0.0, %v654
          %v546 = vphi 0.0, %v729
        $region43: #{tpu_custom_call.1} parent=35 // loop_header_branch
          %543 = sbr.rel (%p540) target = $region47
        $region44: #{tpu_custom_call.1} parent=35 // loop_body
          %s547 = smul.u32 %s539, 8
          %s548 = scalar_lea.vmem [#allocation2], %s547
          %v549 = vld [vmem:[%s548] sm:$0xff]
          %s550 = scalar_lea.vmem [#allocation3], %s547
          %v551 = vld [vmem:[%s550] sm:$0xff]
          %vm552 = vcmask 130048
          %v554 = vsel %vm552, %v536, 0
          %v557 = vsel %vm552, %v549, 0
          %559 = vmatprep.subr.mxu0 0.0
          %560 = vmatpush1.xpose.msra.mxu0 %v557
          %561 = vmatprep.subr.mxu0 0.0
          %562 = vmatpush1.xpose.msra.mxu0 0.0
          %563 = vmatprep.subr.mxu0 0.0
          %564 = vmatpush1.xpose.msra.mxu0 0.0
          %565 = vmatprep.subr.mxu0 0.0
          %566 = vmatpush1.xpose.msra.mxu0 0.0
          %567 = vmatprep.subr.mxu0 0.0
          %568 = vmatpush1.xpose.msra.mxu0 0.0
          %569 = vmatprep.subr.mxu0 0.0
          %570 = vmatpush1.xpose.msra.mxu0 0.0
          %571 = vmatprep.subr.mxu0 0.0
          %572 = vmatpush1.xpose.msra.mxu0 0.0
          %573 = vmatprep.subr.mxu0 0.0
          %574 = vmatpush1.xpose.msra.mxu0 0.0
          %575 = vmatprep.subr.mxu0 0.0
          %576 = vmatpush1.xpose.msra.mxu0 0.0
          %577 = vmatprep.subr.mxu0 0.0
          %578 = vmatpush1.xpose.msra.mxu0 0.0
          %579 = vmatprep.subr.mxu0 0.0
          %580 = vmatpush1.xpose.msra.mxu0 0.0
          %581 = vmatprep.subr.mxu0 0.0
          %582 = vmatpush1.xpose.msra.mxu0 0.0
          %583 = vmatprep.subr.mxu0 0.0
          %584 = vmatpush1.xpose.msra.mxu0 0.0
          %585 = vmatprep.subr.mxu0 0.0
          %586 = vmatpush1.xpose.msra.mxu0 0.0
          %587 = vmatprep.subr.mxu0 0.0
          %588 = vmatpush1.xpose.msra.mxu0 0.0
          %589 = vmatprep.subr.mxu0 0.0
          %590 = vmatpush1.xpose.msra.mxu0 0.0
          %591 = vmatprep.subr.mxu0 0.0
          %592 = vmatpush1.xpose.msra.mxu0 0.0
          %593 = vmatprep.subr.mxu0 0.0
          %594 = vmatpush1.xpose.msra.mxu0 0.0
          %595 = vmatprep.subr.mxu0 0.0
          %596 = vmatpush1.xpose.msra.mxu0 0.0
          %597 = vmatprep.subr.mxu0 0.0
          %598 = vmatpush1.xpose.msra.mxu0 0.0
          %599 = vmatprep.subr.mxu0 0.0
          %600 = vmatpush1.xpose.msra.mxu0 0.0
          %601 = vmatprep.subr.mxu0 0.0
          %602 = vmatpush1.xpose.msra.mxu0 0.0
          %603 = vmatprep.subr.mxu0 0.0
          %604 = vmatpush1.xpose.msra.mxu0 0.0
          %605 = vmatprep.subr.mxu0 0.0
          %606 = vmatpush1.xpose.msra.mxu0 0.0
          %607 = vmatprep.subr.mxu0 0.0
          %608 = vmatpush1.xpose.msra.mxu0 0.0
          %609 = vmatprep.subr.mxu0 0.0
          %610 = vmatpush1.xpose.msra.mxu0 0.0
          %611 = vmatprep.subr.mxu0 0.0
          %612 = vmatpush1.xpose.msra.mxu0 0.0
          %613 = vmatprep.subr.mxu0 0.0
          %614 = vmatpush1.xpose.msra.mxu0 0.0
          %615 = vmatprep.subr.mxu0 0.0
          %616 = vmatpush1.xpose.msra.mxu0 0.0
          %617 = vmatprep.subr.mxu0 0.0
          %618 = vmatpush1.xpose.msra.mxu0 0.0
          %619 = vmatprep.subr.mxu0 0.0
          %620 = vmatpush1.xpose.msra.mxu0 0.0
          %621 = vmatprep.subr.mxu0 0.0
          %622 = vmatpush1.xpose.msra.mxu0 0.0
          %623 = vmatprep.mubr.f32.mxu0 0.0
          %624 = vmatmul.mubr.f32.gmra.mrb[0].mxu0 %v554
          %v625 = vpop.f32.mrb[0].mxu0
          %v626 = vadd.f32 0.0, %v625
          %v627 = vpop.f32.mrb[0].mxu0
          %628 = vdwg.mxu0
          %v629 = vlaneseq
          %v630 = vshrl.u32 %v629, 7
          %v631 = vstv %s455
          %v632 = vadd.s32 %v631, %v630
          %v633 = vlaneseq
          %v634 = vand.u32 %v633, 127
          %v635 = vstv %s547
          %v636 = vadd.s32 %v635, %v634
          %vm637 = vcmp.gt.s32.totalorder %v636, %v632
          %v638 = vsel %vm637, -1e+30, %v626
          %vm639 = vcmask 64512
          %v640 = vsel %vm639, %v638, -inf
          %641 = vmax.xlane.f32.xlu0 %v640
          %v642 = vpop.xlane.xlu0 %641
          %v643 = vmax.f32 %v544, %v642
          %v644 = vsub.f32 %v544, %v643
          %v645 = vmul.f32 %v644, 1.442695
          %v646 = vpow.pop %v645
          %v647 = vsub.f32 %v638, %v643
          %v648 = vmul.f32 %v647, 1.442695
          %v649 = vpow.pop %v648
          %v650 = vmul.f32 %v646, %v545
          %v651 = vsel %vm639, %v649, 0.0
          %652 = vadd.xlane.f32.xlu0 %v651
          %v653 = vpop.xlane.xlu0 %652
          %v654 = vadd.f32 %v650, %v653
          %v655 = vmul.f32 %v646, %v546
          %v657 = vsel %vm639, %v649, 0
          %659 = vmatprep.subr.mxu0 0.0
          %660 = vmatpush1.msra.mxu0 %v551
          %661 = vmatprep.subr.mxu0 0.0
          %662 = vmatpush1.msra.mxu0 0.0
          %663 = vmatprep.subr.mxu0 0.0
          %664 = vmatpush1.msra.mxu0 0.0
          %665 = vmatprep.subr.mxu0 0.0
          %666 = vmatpush1.msra.mxu0 0.0
          %667 = vmatprep.subr.mxu0 0.0
          %668 = vmatpush1.msra.mxu0 0.0
          %669 = vmatprep.subr.mxu0 0.0
          %670 = vmatpush1.msra.mxu0 0.0
          %671 = vmatprep.subr.mxu0 0.0
          %672 = vmatpush1.msra.mxu0 0.0
          %673 = vmatprep.subr.mxu0 0.0
          %674 = vmatpush1.msra.mxu0 0.0
          %675 = vmatprep.subr.mxu0 0.0
          %676 = vmatpush1.msra.mxu0 0.0
          %677 = vmatprep.subr.mxu0 0.0
          %678 = vmatpush1.msra.mxu0 0.0
          %679 = vmatprep.subr.mxu0 0.0
          %680 = vmatpush1.msra.mxu0 0.0
          %681 = vmatprep.subr.mxu0 0.0
          %682 = vmatpush1.msra.mxu0 0.0
          %683 = vmatprep.subr.mxu0 0.0
          %684 = vmatpush1.msra.mxu0 0.0
          %685 = vmatprep.subr.mxu0 0.0
          %686 = vmatpush1.msra.mxu0 0.0
          %687 = vmatprep.subr.mxu0 0.0
          %688 = vmatpush1.msra.mxu0 0.0
          %689 = vmatprep.subr.mxu0 0.0
          %690 = vmatpush1.msra.mxu0 0.0
          %691 = vmatprep.subr.mxu0 0.0
          %692 = vmatpush1.msra.mxu0 0.0
          %693 = vmatprep.subr.mxu0 0.0
          %694 = vmatpush1.msra.mxu0 0.0
          %695 = vmatprep.subr.mxu0 0.0
          %696 = vmatpush1.msra.mxu0 0.0
          %697 = vmatprep.subr.mxu0 0.0
          %698 = vmatpush1.msra.mxu0 0.0
          %699 = vmatprep.subr.mxu0 0.0
          %700 = vmatpush1.msra.mxu0 0.0
          %701 = vmatprep.subr.mxu0 0.0
          %702 = vmatpush1.msra.mxu0 0.0
          %703 = vmatprep.subr.mxu0 0.0
          %704 = vmatpush1.msra.mxu0 0.0
          %705 = vmatprep.subr.mxu0 0.0
          %706 = vmatpush1.msra.mxu0 0.0
          %707 = vmatprep.subr.mxu0 0.0
          %708 = vmatpush1.msra.mxu0 0.0
          %709 = vmatprep.subr.mxu0 0.0
          %710 = vmatpush1.msra.mxu0 0.0
          %711 = vmatprep.subr.mxu0 0.0
          %712 = vmatpush1.msra.mxu0 0.0
          %713 = vmatprep.subr.mxu0 0.0
          %714 = vmatpush1.msra.mxu0 0.0
          %715 = vmatprep.subr.mxu0 0.0
          %716 = vmatpush1.msra.mxu0 0.0
          %717 = vmatprep.subr.mxu0 0.0
          %718 = vmatpush1.msra.mxu0 0.0
          %719 = vmatprep.subr.mxu0 0.0
          %720 = vmatpush1.msra.mxu0 0.0
          %721 = vmatprep.subr.mxu0 0.0
          %722 = vmatpush1.msra.mxu0 0.0
          %723 = vmatprep.mubr.f32.mxu0 0.0
          %724 = vmatmul.mubr.f32.gmra.mrb[0].mxu0 %v657
          %v725 = vpop.f32.mrb[0].mxu0
          %v726 = vadd.f32 0.0, %v725
          %v727 = vpop.f32.mrb[0].mxu0
          %728 = vdwg.mxu0
          %v729 = vadd.f32 %v655, %v726
        $region45: #{tpu_custom_call.1} parent=35 // loop_footer
          %s541 = sadd.s32 %s539, 1
        $region46: #{tpu_custom_call.1} parent=35 // loop_footer_branch
          %538 = sbr.rel target = $region42
        $region47: #{tpu_custom_call.1} parent=35 // loop_exit
          _
        %v730 = vrcp.pop %v545
        %v731 = vmul.f32 %v546, %v730
        %vm732 = vcmask 130048
        %733 = vst.msk [vmem:[%s258] sm:$0xff] %vm732, %v731
        %s734 = sand.u32 %s153, 1
        %s735 = scalar_lea.sflag [#allocation5], %s734
        %s736 = sand.u32 %s153, 1
        %s737 = smul.addr %s736, 8
        %s738 = scalar_lea.vmem [#allocation4], %s737
        // Predicated region
        $region48: #{tpu_custom_call.1} parent=35 // pred_check
          %p739 = pneg %p163
        $region49: #{tpu_custom_call.1} parent=35 // pred_check_branch
          %741 = sbr.rel (%p739) target = $region51
        $region50: #{tpu_custom_call.1} parent=35 // pred_region
          %s743 = ssub.s32 128, 128
          %744 = vsyncadd %s735, %s743
          %s745 = smul.addr %s24, 2
          %s746 = sadd.s32 %s25, %s745
          %s747 = smul.addr %s23, 4
          %s748 = sadd.s32 %s746, %s747
          %s749 = smul.addr %s748, 128
          %s750 = scalar_lea.hbm %s4, %s749
          %s752 = sshll.u32 %s738, 4
          %s753 = int_to_ptr.vmem [resolvable:$true] %s752
          %755 = dma.vmem_to_hbm [thread:$0]  %s753, 128, %s750, %s735
        $region51: #{tpu_custom_call.1} parent=35 // pred_fallthru
          _
      $region36: #{tpu_custom_call.1} parent=5 // pred_fallthru
        _
      %p756 = scmp.le.s32.totalorder 2, %s13
      // Predicated region
      $region52: #{tpu_custom_call.1} parent=5 // pred_check
        %p757 = pneg %p756
      $region53: #{tpu_custom_call.1} parent=5 // pred_check_branch
        %759 = sbr.rel (%p757) target = $region55
      $region54: #{tpu_custom_call.1} parent=5 // pred_region
        %s760 = ssub.s32 %s13, 2
        // Predicated region
        $region56: #{tpu_custom_call.1} parent=54 // pred_check
          %p761 = pneg %p169
        $region57: #{tpu_custom_call.1} parent=54 // pred_check_branch
          %763 = sbr.rel (%p761) target = $region59
        $region58: #{tpu_custom_call.1} parent=54 // pred_region
          %s764 = sand.u32 %s154, 1
          %s765 = scalar_lea.sflag [#allocation5], %s764
          %s766 = sand.u32 %s154, 1
          %s767 = smul.addr %s766, 8
          %s768 = scalar_lea.vmem [#allocation4], %s767
          %769 = dma.done %s765, 128
        $region59: #{tpu_custom_call.1} parent=54 // pred_fallthru
          _
      $region55: #{tpu_custom_call.1} parent=5 // pred_fallthru
        _
    $region6: #{tpu_custom_call.1} parent=1 // loop_footer
      %s17 = sadd.s32 1, %s13
    $region7: #{tpu_custom_call.1} parent=1 // loop_footer_branch
      %12 = sbr.rel target = $region3
    $region8: #{tpu_custom_call.1} parent=1 // loop_exit
      _
    %770 = vsyncpa [#allocation5], 1
    %s771 = scalar_lea.sflag [#allocation5], 1
    %772 = vsyncpa %s771, 1

</llo_original>
